<compile_context>
chip_gen: v7x
topology: tpu7x:2x2x1
jax: 0.10.0
libtpu: 0.0.40
codegen_flags: <defaults>
</compile_context>

<pallas_src>
import math

import jax
import jax.numpy as jnp
import numpy as np
from jax.experimental import pallas as pl
from jax.experimental.pallas import tpu as pltpu


# ------------------------------ Pallas kernels ----------------------------- #

def _scene_relation_kernel_mxu(x_ref, w_ref, b_ref, m_ref, o_ref):
    """Pixel-group (G > 1) path: relation reduction done as one bf16 MXU matmul.

    x_ref: (R, G*Cin)        f32   G consecutive pixels packed per row (lane-dense)
    w_ref: (G*Cin, 2*G*Cout) bf16  block-diag fused [content | re-encode] weight
    b_ref: (1, 2*G*Cout)     f32   fused BN-folded biases
    m_ref: (G*Cout, G*Cout)  bf16  per-image block-diag replication of the scene
                                   vector: one matmul does the per-pixel channel
                                   reduction AND the broadcast back to G*Cout lanes
    o_ref: (R, G*Cout)       bf16  refined features
    """
    x = x_ref[...].astype(jnp.bfloat16)              # free VPU cast, no wrapper pass
    # Single MXU matmul for BOTH 1x1 convs (content encoder + feature re-encoder).
    y = jnp.dot(x, w_ref[...], preferred_element_type=jnp.float32)
    y = jnp.maximum(y + b_ref[...], 0.0)             # conv1x1 + BN(folded) + ReLU
    d = m_ref.shape[0]
    cf = y[:, :d]                                    # content features
    pf = y[:, d:]                                    # re-encoded features
    # relation = sigmoid(sum_c cf * scene), lane-dense bf16 matmul on the MXU.
    z = jnp.dot(cf.astype(jnp.bfloat16), m_ref[...],
                preferred_element_type=jnp.float32)
    rel = pl.reciprocal(1.0 + jnp.exp(-z), approx=True)   # sigmoid on the EUP slot
    o_ref[...] = (rel * pf).astype(o_ref.dtype)


def _scene_relation_kernel_vpu(x_ref, w_ref, b_ref, s_ref, o_ref):
    """G == 1 (Cout >= 128) path: relation reduction off the MXU (VPU mul + XLU
    lane reduce), so the MXU only pays for the two fused 1x1 convs.

    x_ref: (R, Cin)     f32
    w_ref: (Cin, 2*Cout) bf16   fused [content | re-encode] weight
    b_ref: (1, 2*Cout)   f32
    s_ref: (1, Cout)     f32    per-image scene vector
    o_ref: (R, Cout)     bf16
    """
    x = x_ref[...].astype(jnp.bfloat16)
    y = jnp.dot(x, w_ref[...], preferred_element_type=jnp.float32)
    y = jnp.maximum(y + b_ref[...], 0.0)
    d = s_ref.shape[-1]
    cf = y[:, :d]
    pf = y[:, d:]
    z = jnp.sum(cf * s_ref[...], axis=-1, keepdims=True)   # VPU mul + XLU reduce
    rel = pl.reciprocal(1.0 + jnp.exp(-z), approx=True)
    o_ref[...] = (rel * pf).astype(o_ref.dtype)


# ------------------------------ Host wrapper ------------------------------- #

def _group_factor(cin: int, cout: int, p: int) -> int:
    """Smallest pixel-group size G making the output (G*cout) a multiple of 128
    and the input (G*cin) >= 128 lanes, with G | P and G*cin <= 512 to bound the
    block-diagonal zero-flop waste.  Cout >= 128 -> G = 1 (VPU relation path)."""
    if cout >= 128:
        return 1
    base = 128 // math.gcd(128, cout)       # smallest G with (G*cout) % 128 == 0
    best, g = 1, base
    while g * cin <= 512 and g <= p:
        if p % g == 0:
            best = g
            if g * cin >= 128:              # input minor dim lane-dense: done
                break
        g += base
    return best


def _pick_row_tile(rows: int, n_batch: int, cap: int) -> int:
    """Largest row tile <= cap that divides `rows` and keeps bf16-output sublane
    alignment (multiple of 16), with a fallback split so a 'parallel' grid axis
    has >= 2 programs (keeps both v7x TensorCores busy for tiny batches)."""
    if rows <= cap:
        r = rows                             # full dim: always layout-legal
    else:
        r = rows                             # NOTE: pathological H*W with no
        for t in range(cap, 15, -1):         # 16-aligned divisor falls back to
            if rows % t == 0 and t % 16 == 0:  # the full row count (VMEM risk).
                r = t
                break
    if n_batch * (rows // r) < 2:            # guarantee >= 2 parallel programs
        for t in range(r // 2, 15, -1):
            if rows % t == 0 and t % 16 == 0:
                r = t
                break
    return r


def build_plans(params, channel_list, out_channels, feature_shapes):
    """Precompute the fused (block-diagonal) conv weights ONCE per scale.
    They depend only on the params and the feature-map geometry, never on the
    scene vector, so they are hoisted out of the per-forward path."""
    plans = []
    for i, c in enumerate(channel_list):
        h, w = feature_shapes[i]
        p = h * w
        g = _group_factor(c, out_channels, p)
        d = g * out_channels
        cp, rp = params["content"][i], params["reencode"][i]
        if g > 1:
            eye_g = jnp.eye(g, dtype=jnp.float32)
            wc_big = (eye_g[:, None, :, None] * cp["w"][None, :, None, :]
                      ).reshape(g * c, d)
            wr_big = (eye_g[:, None, :, None] * rp["w"][None, :, None, :]
                      ).reshape(g * c, d)
            bc_big, br_big = jnp.tile(cp["b"], g), jnp.tile(rp["b"], g)
        else:
            wc_big, wr_big = cp["w"], rp["w"]
            bc_big, br_big = cp["b"], rp["b"]
        w_big = jnp.concatenate([wc_big, wr_big], axis=1).astype(jnp.bfloat16)
        b_big = jnp.concatenate([bc_big, br_big]).reshape(1, 2 * d
                                                          ).astype(jnp.float32)
        plans.append(dict(G=g, D=d, cout=out_channels, w=w_big, b=b_big))
    return plans


def scene_relation_scale(x_npc, plan, scene_nc, *, out_dtype=jnp.bfloat16,
                         row_tile_cap=1024):
    """One SceneRelation scale. x_npc: (N, P, Cin) f32, scene_nc: (N, Cout) f32."""
    N, P, Cin = x_npc.shape
    G, D, Cout = plan["G"], plan["D"], plan["cout"]
    assert P % G == 0
    rows = P // G

    cap = row_tile_cap
    if G * Cin >= 1024:          # v7x (64 MiB VMEM) budget: smaller tiles at deep Cin
        cap = min(cap, 512)
    R = _pick_row_tile(rows, N, cap)
    assert rows % R == 0

    # (N, P, Cin) -> (N, P//G, G*Cin) is a free row-major reshape.  x stays f32;
    # the bf16 cast happens inside the kernel (no extra wrapper HBM pass).
    x_dense = x_npc.reshape(N, rows, G * Cin)

    if G > 1:
        # Relation projection: m[n, j*Cout+c, j'*Cout+c'] = scene[n, c] * (j == j').
        eye_g = jnp.eye(G, dtype=jnp.float32)
        m = eye_g[None, :, None, :, None] * scene_nc[:, None, :, None, None]
        m = jnp.broadcast_to(m, (N, G, Cout, G, Cout)).reshape(N, D, D)
        rel_arg = m.astype(jnp.bfloat16)
        rel_spec = pl.BlockSpec((pl.Squeezed(), D, D), lambda n, r: (n, 0, 0))
        kernel = _scene_relation_kernel_mxu
    else:
        rel_arg = scene_nc.reshape(N, 1, Cout).astype(jnp.float32)
        rel_spec = pl.BlockSpec((pl.Squeezed(), 1, Cout), lambda n, r: (n, 0, 0))
        kernel = _scene_relation_kernel_vpu

    out = pl.pallas_call(
        kernel,
        out_shape=jax.ShapeDtypeStruct((N, rows, D), out_dtype),
        grid_spec=pltpu.PrefetchScalarGridSpec(
            num_scalar_prefetch=0,
            grid=(N, rows // R),
            in_specs=[
                pl.BlockSpec((pl.Squeezed(), R, G * Cin), lambda n, r: (n, r, 0)),
                pl.BlockSpec((G * Cin, 2 * D), lambda n, r: (0, 0)),
                pl.BlockSpec((1, 2 * D), lambda n, r: (0, 0)),
                rel_spec,
            ],
            out_specs=pl.BlockSpec((pl.Squeezed(), R, D), lambda n, r: (n, r, 0)),
        ),
        compiler_params=pltpu.CompilerParams(
            dimension_semantics=("parallel", "parallel")),
    )(x_dense, plan["w"], plan["b"], rel_arg)

    # (N, P//G, G*Cout) and (N, P, Cout) are the same bytes row-major.
    return out.reshape(N, P, Cout)


# ----------------------------- Parameter glue ----------------------------- #

def fold_conv_bn(w_cico, b_co, gamma, beta, mean, var, eps=1e-5):
    """Fold eval-mode BatchNorm into a 1x1 conv (channels-last matmul form)."""
    scale = gamma / jnp.sqrt(var + eps)
    return w_cico * scale[None, :], (b_co - mean) * scale + beta


def init_params(key, in_channels, channel_list, out_channels):
    params = {"scene": [], "content": [], "reencode": []}
    n_scales = len(channel_list)
    keys = jax.random.split(key, 16 * n_scales)
    ki = iter(range(len(keys)))

    def nrm(shape, scale=0.1):
        return scale * jax.random.normal(keys[next(ki)], shape, jnp.float32)

    for c in channel_list:
        # scene_encoder[i]: conv(in->out) + ReLU + conv(out->out)
        params["scene"].append(dict(
            w1=nrm((in_channels, out_channels)), b1=nrm((out_channels,)),
            w2=nrm((out_channels, out_channels)), b2=nrm((out_channels,)),
        ))
        # content_encoders[i]: conv(c->out) + BN + ReLU  (BN eval-mode, folded)
        wc = nrm((c, out_channels)); bc = nrm((out_channels,))
        gamma = 1.0 + nrm((out_channels,), 0.05)
        beta = nrm((out_channels,), 0.05)
        mean = nrm((out_channels,), 0.05)
        var = 1.0 + 0.1 * jnp.abs(nrm((out_channels,), 1.0))
        wc_f, bc_f = fold_conv_bn(wc, bc, gamma, beta, mean, var)
        params["content"].append(dict(w=wc_f, b=bc_f))
        # feature_reencoders[i]: conv(c->out) + BN + ReLU
        wr = nrm((c, out_channels)); br = nrm((out_channels,))
        gamma = 1.0 + nrm((out_channels,), 0.05)
        beta = nrm((out_channels,), 0.05)
        mean = nrm((out_channels,), 0.05)
        var = 1.0 + 0.1 * jnp.abs(nrm((out_channels,), 1.0))
        wr_f, br_f = fold_conv_bn(wr, br, gamma, beta, mean, var)
        params["reencode"].append(dict(w=wr_f, b=br_f))
    return params


def scene_relation_forward(scene_feature_nc, features_nhwc, params, plans,
                           out_dtype=jnp.bfloat16):
    """scene_feature_nc: (N, in_ch); features_nhwc: list of (N, H, W, C_i)."""
    refined = []
    for i, feat in enumerate(features_nhwc):
        N, H, W, Cin = feat.shape
        sp = params["scene"][i]
        # scale-aware scene encoder (tiny per-image MLP, plain-JAX glue): (N, Cout)
        s = jnp.maximum(scene_feature_nc @ sp["w1"] + sp["b1"], 0.0)
        s = s @ sp["w2"] + sp["b2"]
        out = scene_relation_scale(feat.reshape(N, H * W, Cin), plans[i], s,
                                   out_dtype=out_dtype)
        refined.append(out.reshape(N, H, W, -1))
    return refined


def scene_relation_reference(scene_feature_nc, features_nhwc, params):
    """Pure-JAX f32 reference (same math as the PyTorch module, NHWC layout)."""
    outs = []
    for i, feat in enumerate(features_nhwc):
        sp = params["scene"][i]
        s = jnp.maximum(scene_feature_nc @ sp["w1"] + sp["b1"], 0.0)
        s = s @ sp["w2"] + sp["b2"]                      # (N, Cout)
        cp, rp = params["content"][i], params["reencode"][i]
        cf = jax.nn.relu(jnp.einsum("nhwc,cd->nhwd", feat, cp["w"]) + cp["b"])
        pf = jax.nn.relu(jnp.einsum("nhwc,cd->nhwd", feat, rp["w"]) + rp["b"])
        rel = jax.nn.sigmoid(
            jnp.sum(cf * s[:, None, None, :], axis=-1, keepdims=True))
        outs.append(rel * pf)
    return outs


# --------------------------------- main ------------------------------------ #

def _run_config(key, N, in_channels, out_channels, channel_list, spatial):
    k_scene, k_feat, k_params = jax.random.split(key, 3)
    scene_feature_nchw = jax.random.normal(
        k_scene, (N, in_channels, 1, 1), jnp.float32)
    feat_keys = jax.random.split(k_feat, len(channel_list))
    features_nchw = [
        jax.random.normal(feat_keys[i],
                          (N, channel_list[i], spatial[i][0], spatial[i][1]),
                          jnp.float32)
        for i in range(len(channel_list))
    ]
    scene_feature = scene_feature_nchw.reshape(N, in_channels)
    features = [jnp.transpose(f, (0, 2, 3, 1)) for f in features_nchw]

    params = init_params(k_params, in_channels, channel_list, out_channels)
    plans = build_plans(params, channel_list, out_channels, spatial)

    refined = scene_relation_forward(scene_feature, features, params, plans)
    refined = [jax.block_until_ready(r) for r in refined]

    expected = scene_relation_reference(scene_feature, features, params)
    # bf16 weights/activations/outputs on the kernel path -> loosened tolerance.
    for got, exp in zip(refined, expected):
        np.testing.assert_allclose(np.asarray(got, dtype=np.float32),
                                   np.asarray(exp), rtol=4e-2, atol=4e-2)


if __name__ == "__main__":
    root = jax.random.PRNGKey(0)
    k_a, k_b = jax.random.split(root)

    # Config A: small Cout -> pixel-group (G > 1) MXU-relation kernel path.
    _run_config(k_a, N=2, in_channels=32, out_channels=32,
                channel_list=[16, 32], spatial=[(16, 16), (8, 8)])

    # Config B: Cout = 128 -> G == 1, relation on VPU/XLU (real-FarSeg regime).
    _run_config(k_b, N=2, in_channels=32, out_channels=128,
                channel_list=[128], spatial=[(8, 8)])

    print("KERNEL_OK")
</pallas_src>

<mosaic_0001>
module attributes {stable_mosaic.version = 11 : i64} {
  func.func @_scene_relation_kernel_mxu(%arg0: i32, %arg1: i32, %arg2: memref<1x32x128xf32, #tpu.memory_space<vmem>>, %arg3: memref<128x512xbf16, #tpu.memory_space<vmem>>, %arg4: memref<1x512xf32, #tpu.memory_space<vmem>>, %arg5: memref<1x256x256xbf16, #tpu.memory_space<vmem>>, %arg6: memref<1x32x256xbf16, #tpu.memory_space<vmem>>) attributes {dimension_semantics = [#tpu.dimension_semantics<parallel>, #tpu.dimension_semantics<parallel>], iteration_bounds = array<i64: 2, 1>, scalar_prefetch = 0 : i64, scratch_operands = 0 : i64, tpu.core_type = #tpu.core_type<tc>, window_params = [{transform_indices = @transform_0, window_bounds = array<i64: 1, 32, 128>}, {pipeline_mode = #tpu.pipeline_mode<synchronous>, transform_indices = @transform_1, window_bounds = array<i64: 128, 512>}, {pipeline_mode = #tpu.pipeline_mode<synchronous>, transform_indices = @transform_2, window_bounds = array<i64: 1, 512>}, {transform_indices = @transform_3, window_bounds = array<i64: 1, 256, 256>}, {transform_indices = @transform_4, window_bounds = array<i64: 1, 32, 256>}]} {
    %c0 = arith.constant 0 : index
    %c0_0 = arith.constant 0 : index
    %c0_1 = arith.constant 0 : index
    %0 = vector.load %arg2[%c0, %c0_0, %c0_1] : memref<1x32x128xf32, #tpu.memory_space<vmem>>, vector<1x32x128xf32>
    %1 = vector.shape_cast %0 : vector<1x32x128xf32> to vector<32x128xf32>
    %2 = arith.truncf %1 : vector<32x128xf32> to vector<32x128xbf16>
    %c0_2 = arith.constant 0 : index
    %c0_3 = arith.constant 0 : index
    %3 = vector.load %arg3[%c0_2, %c0_3] : memref<128x512xbf16, #tpu.memory_space<vmem>>, vector<128x512xbf16>
    %cst = arith.constant dense<0.000000e+00> : vector<32x512xf32>
    %4 = tpu.matmul %2, %3, %cst {dimension_numbers = #tpu.dot_dimension_numbers<[1], [0], [0], [1], [0, 0, 1, 1], [], []>} : vector<32x128xbf16>, vector<128x512xbf16>, vector<32x512xf32> -> vector<32x512xf32>
    %c0_4 = arith.constant 0 : index
    %c0_5 = arith.constant 0 : index
    %5 = vector.load %arg4[%c0_4, %c0_5] : memref<1x512xf32, #tpu.memory_space<vmem>>, vector<1x512xf32>
    %6 = vector.broadcast %5 : vector<1x512xf32> to vector<32x512xf32>
    %7 = arith.addf %4, %6 : vector<32x512xf32>
    %cst_6 = arith.constant 0.000000e+00 : f32
    %8 = vector.broadcast %cst_6 : f32 to vector<32x512xf32>
    %9 = arith.maximumf %7, %8 : vector<32x512xf32>
    %10 = vector.extract_strided_slice %9 {offsets = [0, 0], sizes = [32, 256], strides = [1, 1]} : vector<32x512xf32> to vector<32x256xf32>
    %11 = vector.extract_strided_slice %9 {offsets = [0, 256], sizes = [32, 256], strides = [1, 1]} : vector<32x512xf32> to vector<32x256xf32>
    %12 = arith.truncf %10 : vector<32x256xf32> to vector<32x256xbf16>
    %c0_7 = arith.constant 0 : index
    %c0_8 = arith.constant 0 : index
    %c0_9 = arith.constant 0 : index
    %13 = vector.load %arg5[%c0_7, %c0_8, %c0_9] : memref<1x256x256xbf16, #tpu.memory_space<vmem>>, vector<1x256x256xbf16>
    %14 = vector.shape_cast %13 : vector<1x256x256xbf16> to vector<256x256xbf16>
    %cst_10 = arith.constant dense<0.000000e+00> : vector<32x256xf32>
    %15 = tpu.matmul %12, %14, %cst_10 {dimension_numbers = #tpu.dot_dimension_numbers<[1], [0], [0], [1], [0, 0, 1, 1], [], []>} : vector<32x256xbf16>, vector<256x256xbf16>, vector<32x256xf32> -> vector<32x256xf32>
    %cst_11 = arith.constant 0.000000e+00 : f32
    %16 = vector.broadcast %cst_11 : f32 to vector<32x256xf32>
    %17 = arith.subf %16, %15 : vector<32x256xf32>
    %18 = math.exp %17 : vector<32x256xf32>
    %cst_12 = arith.constant 1.000000e+00 : f32
    %19 = vector.broadcast %cst_12 : f32 to vector<32x256xf32>
    %20 = arith.addf %19, %18 : vector<32x256xf32>
    %21 = tpu.reciprocal %20 {approx = true} : vector<32x256xf32> -> vector<32x256xf32>
    %22 = arith.mulf %21, %11 : vector<32x256xf32>
    %23 = arith.truncf %22 : vector<32x256xf32> to vector<32x256xbf16>
    %c0_13 = arith.constant 0 : index
    %c0_14 = arith.constant 0 : index
    %c0_15 = arith.constant 0 : index
    %24 = vector.load %arg6[%c0_13, %c0_14, %c0_15] : memref<1x32x256xbf16, #tpu.memory_space<vmem>>, vector<1x32x256xbf16>
    %25 = vector.shape_cast %24 : vector<1x32x256xbf16> to vector<32x256xbf16>
    %26 = vector.shape_cast %23 : vector<32x256xbf16> to vector<1x32x256xbf16>
    tpu.vector_store %arg6[%c0_13, %c0_14, %c0_15], %26 {strides = array<i32>} : memref<1x32x256xbf16, #tpu.memory_space<vmem>>, vector<1x32x256xbf16>,
    return
  }
  func.func @transform_0(%arg0: i32, %arg1: i32) -> (i32, i32, i32) {
    %c0_i32 = arith.constant 0 : i32
    %c0_i32_0 = arith.constant 0 : i32
    return %arg0, %arg1, %c0_i32 : i32, i32, i32
  }
  func.func @transform_1(%arg0: i32, %arg1: i32) -> (i32, i32) {
    %c0_i32 = arith.constant 0 : i32
    %c0_i32_0 = arith.constant 0 : i32
    %c0_i32_1 = arith.constant 0 : i32
    return %c0_i32, %c0_i32_0 : i32, i32
  }
  func.func @transform_2(%arg0: i32, %arg1: i32) -> (i32, i32) {
    %c0_i32 = arith.constant 0 : i32
    %c0_i32_0 = arith.constant 0 : i32
    %c0_i32_1 = arith.constant 0 : i32
    return %c0_i32, %c0_i32_0 : i32, i32
  }
  func.func @transform_3(%arg0: i32, %arg1: i32) -> (i32, i32, i32) {
    %c0_i32 = arith.constant 0 : i32
    %c0_i32_0 = arith.constant 0 : i32
    %c0_i32_1 = arith.constant 0 : i32
    return %arg0, %c0_i32, %c0_i32_0 : i32, i32, i32
  }
  func.func @transform_4(%arg0: i32, %arg1: i32) -> (i32, i32, i32) {
    %c0_i32 = arith.constant 0 : i32
    %c0_i32_0 = arith.constant 0 : i32
    return %arg0, %arg1, %c0_i32 : i32, i32, i32
  }
}

</mosaic_0001>

<llo_original>
// kernel: tpu_custom_call.1
$region0: #{tpu_custom_call.1}
  #allocation0 [shape = 'u32[]', space=smem, size = 0x4, offset = 0x4, fixed_abs, tag = 'smem constant byte address 0x4 - core index']
  #allocation1 [shape = 'u32[144,128]{1,0:T(1,128)}', space=vmem, size = 0x12000, scoped, tag = 'internal scratch']
  %s0 = inlined_call_operand.hbm [shape: f32[2,32,128], index: 0, kind: input, shape index: {}]
  %s1 = inlined_call_operand.hbm [shape: bf16[128,512], index: 1, kind: input, shape index: {}]
  %s2 = inlined_call_operand.vmem [shape: f32[1,512], index: 2, kind: input, shape index: {}]
  %s3 = inlined_call_operand.hbm [shape: bf16[2,256,256], index: 3, kind: input, shape index: {}]
  %s4 = inlined_call_operand.hbm [shape: bf16[2,32,256], index: 4, kind: output, shape index: {}]
  %s5 = sld [smem:[#allocation0]]
  $region61: #{tpu_custom_call.1} parent=0
    _
  %s7 = ssub.s32 1, %s5
  %s8 = scalar_select 0, %s7, %s5
  $region1: #{tpu_custom_call.1} parent=0
    #allocation2 [shape = 'u8[32768]{0}', space=vmem, size = 0x8000, scoped, tag = 'input window, operand 0']
    #allocation3 [shape = 's32[2]{0}', space=sflag, size = 0x8, scoped, tag = 'scoped memory for tpu_custom_call.1']
    #allocation4 [shape = 's32[2]{0}', space=sflag, size = 0x8, scoped, tag = 'scoped memory for tpu_custom_call.1']
    #allocation5 [shape = 'u8[131072]{0}', space=vmem, size = 0x20000, scoped, tag = 'input window, operand 1, single buffered']
    #allocation6 [shape = 's32[1]{0}', space=sflag, size = 0x4, scoped, tag = 'scoped memory for tpu_custom_call.1']
    #allocation7 [shape = 'u8[262144]{0}', space=vmem, size = 0x40000, scoped, tag = 'input window, operand 3']
    #allocation8 [shape = 'u8[32768]{0}', space=vmem, size = 0x8000, scoped, tag = 'output window, operand 0']
    %9 = vsyncpa [#allocation3], 0
    %s10 = scalar_lea.sflag [#allocation3], 1
    %11 = vsyncpa %s10, 0
    %12 = vsyncpa [#allocation6], 0
    %13 = vsyncpa [#allocation4], 0
    %s14 = scalar_lea.sflag [#allocation4], 1
    %15 = vsyncpa %s14, 0
    loop: start=0, step=1, limit=4
    $region2: #{tpu_custom_call.1} parent=1 // loop_pre_header
      _
    $region3: #{tpu_custom_call.1} parent=1 // loop_header
      %s17 = sphi 0, %s21
      %p18 = scmp.ge.s32.totalorder %s17, 4
      %s24 = sphi 0, %s36
      %s25 = sphi 0, %s32
      %s26 = sphi 0, %s24
      %s27 = sphi 0, %s25
      %s28 = sphi 0, %s26
      %s29 = sphi 0, %s27
      %s41 = sphi 0, %s43
      %s44 = sphi 0, %s41
      %s45 = sphi 0, %s44
      %s61 = sphi 0, %s45
      %s65 = sphi 0, %s65
      %s67 = sphi 0, %s65
      %s68 = sphi 0, %s67
      %s82 = sphi 0, %s68
      %s86 = sphi 0, %s86
      %s88 = sphi 0, %s86
      %s89 = sphi 0, %s88
      %s103 = sphi 0, %s89
      %s109 = sphi 0, %s111
      %s112 = sphi 0, %s109
      %s113 = sphi 0, %s112
      %s129 = sphi 0, %s113
      %s137 = sphi 0, %s139
      %s140 = sphi 0, %s137
      %s141 = sphi 0, %s140
      %s157 = sphi 0, %s141
    $region4: #{tpu_custom_call.1} parent=1 // loop_header_branch
      %20 = sbr.rel (%p18) target = $region8
    $region5: #{tpu_custom_call.1} parent=1 // loop_body
      %s22 = ssub.s32 %s17, 1
      %s23 = ssub.s32 %s17, 2
      %s30 = sadd.s32 1, %s25
      %p31 = scmp.ge.s32.totalorder %s30, 1
      %s32 = scalar_select %p31, 0, %s30
      %s33 = sadd.s32 1, %s24
      %s34 = scalar_select %p31, %s33, %s24
      %p35 = scmp.ge.s32.totalorder %s34, 2
      %s36 = scalar_select %p35, 0, %s34
      %s37 = ssub.s32 %s24, %s36
      %s38 = ssub.s32 %s25, %s32
      %s39 = sor.u32 %s37, %s38
      %p40 = scmp.eq.s32.totalorder %s39, 0
      %s42 = sadd.s32 %s41, 1
      %s43 = scalar_select %p40, %s41, %s42
      %p46 = pneg %p40
      %p47 = scmp.eq.s32.totalorder %s17, 1
      %p48 = por %p46, %p47
      %p49 = scmp.ne.s32.totalorder %s41, %s44
      %p50 = scmp.eq.s32.totalorder %s17, 0
      %p51 = por %p49, %p50
      %p52 = scmp.ne.s32.totalorder %s41, %s44
      %p53 = scmp.eq.s32.totalorder %s22, 1
      %p54 = por %p52, %p53
      %p55 = scmp.ne.s32.totalorder %s44, %s45
      %p56 = scmp.eq.s32.totalorder %s22, 0
      %p57 = por %p55, %p56
      %p58 = scmp.ne.s32.totalorder %s44, %s45
      %p59 = scmp.eq.s32.totalorder %s23, 1
      %p60 = por %p58, %p59
      %p62 = scmp.ne.s32.totalorder %s45, %s61
      %p63 = scmp.eq.s32.totalorder %s23, 0
      %p64 = por %p62, %p63
      %s66 = sadd.s32 %s65, 1
      %p69 = scmp.eq.s32.totalorder %s17, 1
      %p70 = scmp.ne.s32.totalorder %s65, %s67
      %p71 = scmp.eq.s32.totalorder %s17, 0
      %p72 = por %p70, %p71
      %p73 = scmp.ne.s32.totalorder %s65, %s67
      %p74 = scmp.eq.s32.totalorder %s22, 1
      %p75 = por %p73, %p74
      %p76 = scmp.ne.s32.totalorder %s67, %s68
      %p77 = scmp.eq.s32.totalorder %s22, 0
      %p78 = por %p76, %p77
      %p79 = scmp.ne.s32.totalorder %s67, %s68
      %p80 = scmp.eq.s32.totalorder %s23, 1
      %p81 = por %p79, %p80
      %p83 = scmp.ne.s32.totalorder %s68, %s82
      %p84 = scmp.eq.s32.totalorder %s23, 0
      %p85 = por %p83, %p84
      %s87 = sadd.s32 %s86, 1
      %p90 = scmp.eq.s32.totalorder %s17, 1
      %p91 = scmp.ne.s32.totalorder %s86, %s88
      %p92 = scmp.eq.s32.totalorder %s17, 0
      %p93 = por %p91, %p92
      %p94 = scmp.ne.s32.totalorder %s86, %s88
      %p95 = scmp.eq.s32.totalorder %s22, 1
      %p96 = por %p94, %p95
      %p97 = scmp.ne.s32.totalorder %s88, %s89
      %p98 = scmp.eq.s32.totalorder %s22, 0
      %p99 = por %p97, %p98
      %p100 = scmp.ne.s32.totalorder %s88, %s89
      %p101 = scmp.eq.s32.totalorder %s23, 1
      %p102 = por %p100, %p101
      %p104 = scmp.ne.s32.totalorder %s89, %s103
      %p105 = scmp.eq.s32.totalorder %s23, 0
      %p106 = por %p104, %p105
      %s107 = ssub.s32 %s24, %s36
      %p108 = scmp.eq.s32.totalorder %s107, 0
      %s110 = sadd.s32 %s109, 1
      %s111 = scalar_select %p108, %s109, %s110
      %p114 = pneg %p108
      %p115 = scmp.eq.s32.totalorder %s17, 1
      %p116 = por %p114, %p115
      %p117 = scmp.ne.s32.totalorder %s109, %s112
      %p118 = scmp.eq.s32.totalorder %s17, 0
      %p119 = por %p117, %p118
      %p120 = scmp.ne.s32.totalorder %s109, %s112
      %p121 = scmp.eq.s32.totalorder %s22, 1
      %p122 = por %p120, %p121
      %p123 = scmp.ne.s32.totalorder %s112, %s113
      %p124 = scmp.eq.s32.totalorder %s22, 0
      %p125 = por %p123, %p124
      %p126 = scmp.ne.s32.totalorder %s112, %s113
      %p127 = scmp.eq.s32.totalorder %s23, 1
      %p128 = por %p126, %p127
      %p130 = scmp.ne.s32.totalorder %s113, %s129
      %p131 = scmp.eq.s32.totalorder %s23, 0
      %p132 = por %p130, %p131
      %s133 = ssub.s32 %s24, %s36
      %s134 = ssub.s32 %s25, %s32
      %s135 = sor.u32 %s133, %s134
      %p136 = scmp.eq.s32.totalorder %s135, 0
      %s138 = sadd.s32 %s137, 1
      %s139 = scalar_select %p136, %s137, %s138
      %p142 = pneg %p136
      %p143 = scmp.eq.s32.totalorder %s17, 1
      %p144 = por %p142, %p143
      %p145 = scmp.ne.s32.totalorder %s137, %s140
      %p146 = scmp.eq.s32.totalorder %s17, 0
      %p147 = por %p145, %p146
      %p148 = scmp.ne.s32.totalorder %s137, %s140
      %p149 = scmp.eq.s32.totalorder %s22, 1
      %p150 = por %p148, %p149
      %p151 = scmp.ne.s32.totalorder %s140, %s141
      %p152 = scmp.eq.s32.totalorder %s22, 0
      %p153 = por %p151, %p152
      %p154 = scmp.ne.s32.totalorder %s140, %s141
      %p155 = scmp.eq.s32.totalorder %s23, 1
      %p156 = por %p154, %p155
      %p158 = scmp.ne.s32.totalorder %s141, %s157
      %p159 = scmp.eq.s32.totalorder %s23, 0
      %p160 = por %p158, %p159
      %p161 = scmp.le.s32.totalorder 1, %s17
      %p162 = scmp.lt.s32.totalorder %s17, 3
      %p163 = pnand %p161, %p162
      %p164 = pneg %p163
      // Predicated region
      $region9: #{tpu_custom_call.1} parent=5 // pred_check
        _
      $region10: #{tpu_custom_call.1} parent=5 // pred_check_branch
        %166 = sbr.rel (%p163) target = $region12
      $region11: #{tpu_custom_call.1} parent=5 // pred_region
        %s167 = ssub.s32 %s17, 1
        // Predicated region
        $region13: #{tpu_custom_call.1} parent=11 // pred_check
          %p168 = pneg %p78
        $region14: #{tpu_custom_call.1} parent=11 // pred_check_branch
          %170 = sbr.rel (%p168) target = $region16
        $region15: #{tpu_custom_call.1} parent=11 // pred_region
          %s172 = ssub.s32 4096, 4096
          %173 = vsyncadd [#allocation6], %s172
          %s174 = sshll.u32 [#allocation5], 4
          %s175 = int_to_ptr.vmem [resolvable:$true] %s174
          %180 = dma.hbm_to_vmem [thread:$0]  %s1, 4096, %s175, [#allocation6], 256, 256, 16
        $region16: #{tpu_custom_call.1} parent=11 // pred_fallthru
          _
        // Predicated region
        $region17: #{tpu_custom_call.1} parent=11 // pred_check
          %p181 = pneg %p99
        $region18: #{tpu_custom_call.1} parent=11 // pred_check_branch
          %183 = sbr.rel (%p181) target = $region20
        $region19: #{tpu_custom_call.1} parent=11 // pred_region
          _
        $region20: #{tpu_custom_call.1} parent=11 // pred_fallthru
          _
      $region12: #{tpu_custom_call.1} parent=5 // pred_fallthru
        _
      %p184 = scmp.lt.s32.totalorder %s17, 2
      // Predicated region
      $region21: #{tpu_custom_call.1} parent=5 // pred_check
        %p185 = pneg %p184
      $region22: #{tpu_custom_call.1} parent=5 // pred_check_branch
        %187 = sbr.rel (%p185) target = $region24
      $region23: #{tpu_custom_call.1} parent=5 // pred_region
        // Predicated region
        $region25: #{tpu_custom_call.1} parent=23 // pred_check
          %p188 = pneg %p51
        $region26: #{tpu_custom_call.1} parent=23 // pred_check_branch
          %190 = sbr.rel (%p188) target = $region28
        $region27: #{tpu_custom_call.1} parent=23 // pred_region
          %s191 = sand.u32 %s17, 1
          %s192 = scalar_lea.sflag [#allocation3], %s191
          %s193 = sand.u32 %s41, 1
          %s194 = smul.addr %s193, 32
          %s195 = scalar_lea.vmem [#allocation2], %s194
          %s196 = smul.u32 4, %s25
          %s198 = ssub.s32 512, 512
          %199 = vsyncadd %s192, %s198
          %s200 = smul.addr %s24, 4
          %s201 = sadd.s32 %s196, %s200
          %s202 = smul.addr %s201, 128
          %s203 = scalar_lea.hbm %s0, %s202
          %s204 = sshll.u32 %s195, 4
          %s205 = int_to_ptr.vmem [resolvable:$true] %s204
          %210 = dma.hbm_to_vmem [thread:$0]  %s203, 512, %s205, %s192, 128, 128, 8
        $region28: #{tpu_custom_call.1} parent=23 // pred_fallthru
          _
        // Predicated region
        $region29: #{tpu_custom_call.1} parent=23 // pred_check
          %p211 = pneg %p119
        $region30: #{tpu_custom_call.1} parent=23 // pred_check_branch
          %213 = sbr.rel (%p211) target = $region32
        $region31: #{tpu_custom_call.1} parent=23 // pred_region
          %s214 = sand.u32 %s17, 1
          %s215 = scalar_lea.sflag [#allocation3], %s214
          %s216 = sand.u32 %s109, 1
          %s217 = smul.addr %s216, 256
          %s218 = scalar_lea.vmem [#allocation7], %s217
          %s220 = ssub.s32 4096, 4096
          %221 = vsyncadd %s215, %s220
          %s222 = smul.addr %s24, 64
          %s223 = smul.addr %s222, 64
          %s224 = scalar_lea.hbm %s3, %s223
          %s225 = sshll.u32 %s218, 4
          %s226 = int_to_ptr.vmem [resolvable:$true] %s225
          %231 = dma.hbm_to_vmem [thread:$0]  %s224, 4096, %s226, %s215, 128, 128, 8
        $region32: #{tpu_custom_call.1} parent=23 // pred_fallthru
          _
      $region24: #{tpu_custom_call.1} parent=5 // pred_fallthru
        _
      %p232 = scmp.le.s32.totalorder 1, %s17
      %p233 = scmp.lt.s32.totalorder %s17, 3
      %p234 = pnand %p232, %p233
      %p235 = pneg %p234
      // Predicated region
      $region33: #{tpu_custom_call.1} parent=5 // pred_check
        _
      $region34: #{tpu_custom_call.1} parent=5 // pred_check_branch
        %237 = sbr.rel (%p234) target = $region36
      $region35: #{tpu_custom_call.1} parent=5 // pred_region
        %s238 = ssub.s32 %s17, 1
        %s239 = sand.u32 %s22, 1
        %s240 = scalar_lea.sflag [#allocation3], %s239
        %s241 = sand.u32 %s44, 1
        %s242 = smul.addr %s241, 32
        %s243 = scalar_lea.vmem [#allocation2], %s242
        // Predicated region
        $region37: #{tpu_custom_call.1} parent=35 // pred_check
          %p244 = pneg %p57
        $region38: #{tpu_custom_call.1} parent=35 // pred_check_branch
          %246 = sbr.rel (%p244) target = $region40
        $region39: #{tpu_custom_call.1} parent=35 // pred_region
          %247 = dma.done %s240, 512
        $region40: #{tpu_custom_call.1} parent=35 // pred_fallthru
          _
        // Predicated region
        $region41: #{tpu_custom_call.1} parent=35 // pred_check
          %p248 = pneg %p78
        $region42: #{tpu_custom_call.1} parent=35 // pred_check_branch
          %250 = sbr.rel (%p248) target = $region44
        $region43: #{tpu_custom_call.1} parent=35 // pred_region
          %251 = dma.done [#allocation6], 4096
        $region44: #{tpu_custom_call.1} parent=35 // pred_fallthru
          _
        %s252 = sand.u32 %s22, 1
        %s253 = scalar_lea.sflag [#allocation3], %s252
        %s254 = sand.u32 %s112, 1
        %s255 = smul.addr %s254, 256
        %s256 = scalar_lea.vmem [#allocation7], %s255
        // Predicated region
        $region45: #{tpu_custom_call.1} parent=35 // pred_check
          %p257 = pneg %p125
        $region46: #{tpu_custom_call.1} parent=35 // pred_check_branch
          %259 = sbr.rel (%p257) target = $region48
        $region47: #{tpu_custom_call.1} parent=35 // pred_region
          %260 = dma.done %s253, 4096
        $region48: #{tpu_custom_call.1} parent=35 // pred_fallthru
          _
        %s261 = sand.u32 %s22, 1
        %s262 = scalar_lea.sflag [#allocation3], %s261
        %s263 = sand.u32 %s44, 1
        %s264 = smul.addr %s263, 32
        %s265 = scalar_lea.vmem [#allocation2], %s264
        %p266 = pneg %p57
        %p267 = pneg %p54
        %p268 = pneg %p78
        %p269 = pneg %p75
        %p270 = pneg %p99
        %p271 = pneg %p96
        %s272 = sand.u32 %s22, 1
        %s273 = scalar_lea.sflag [#allocation3], %s272
        %s274 = sand.u32 %s112, 1
        %s275 = smul.addr %s274, 256
        %s276 = scalar_lea.vmem [#allocation7], %s275
        %p277 = pneg %p125
        %p278 = pneg %p122
        %p279 = pneg %p153
        %p280 = pneg %p150
        %s281 = sand.u32 %s140, 1
        %s282 = scalar_lea.sflag [#allocation4], %s281
        %s283 = sand.u32 %s140, 1
        %s284 = smul.addr %s283, 32
        %s285 = scalar_lea.vmem [#allocation8], %s284
        %s286 = smul.u32 4, %s27
        %s287 = smul.u32 4, %s27
        %v289 = vld [vmem:[%s243] sm:$0xff]
        %v290 = vld [vmem:[%s243 + $0x8] sm:$0xff]
        %v291 = vld [vmem:[%s243 + $0x10] sm:$0xff]
        %v292 = vld [vmem:[%s243 + $0x18] sm:$0xff]
        %v293 = vpack.c.bf16 %v290, %v289
        %v294 = vpack.c.bf16 %v292, %v291
        %v295 = vld [vmem:[#allocation5] sm:$0xff]
        %v296 = vld [vmem:[#allocation5 + $0x8] sm:$0xff]
        %v297 = vld [vmem:[#allocation5 + $0x10] sm:$0xff]
        %v298 = vld [vmem:[#allocation5 + $0x18] sm:$0xff]
        %v299 = vld [vmem:[#allocation5 + $0x20] sm:$0xff]
        %v300 = vld [vmem:[#allocation5 + $0x28] sm:$0xff]
        %v301 = vld [vmem:[#allocation5 + $0x30] sm:$0xff]
        %v302 = vld [vmem:[#allocation5 + $0x38] sm:$0xff]
        %v303 = vld [vmem:[#allocation5 + $0x40] sm:$0xff]
        %v304 = vld [vmem:[#allocation5 + $0x48] sm:$0xff]
        %v305 = vld [vmem:[#allocation5 + $0x50] sm:$0xff]
        %v306 = vld [vmem:[#allocation5 + $0x58] sm:$0xff]
        %v307 = vld [vmem:[#allocation5 + $0x60] sm:$0xff]
        %v308 = vld [vmem:[#allocation5 + $0x68] sm:$0xff]
        %v309 = vld [vmem:[#allocation5 + $0x70] sm:$0xff]
        %v310 = vld [vmem:[#allocation5 + $0x78] sm:$0xff]
        %v311 = vld [vmem:[#allocation5 + $0x80] sm:$0xff]
        %v312 = vld [vmem:[#allocation5 + $0x88] sm:$0xff]
        %v313 = vld [vmem:[#allocation5 + $0x90] sm:$0xff]
        %v314 = vld [vmem:[#allocation5 + $0x98] sm:$0xff]
        %v315 = vld [vmem:[#allocation5 + $0xa0] sm:$0xff]
        %v316 = vld [vmem:[#allocation5 + $0xa8] sm:$0xff]
        %v317 = vld [vmem:[#allocation5 + $0xb0] sm:$0xff]
        %v318 = vld [vmem:[#allocation5 + $0xb8] sm:$0xff]
        %v319 = vld [vmem:[#allocation5 + $0xc0] sm:$0xff]
        %v320 = vld [vmem:[#allocation5 + $0xc8] sm:$0xff]
        %v321 = vld [vmem:[#allocation5 + $0xd0] sm:$0xff]
        %v322 = vld [vmem:[#allocation5 + $0xd8] sm:$0xff]
        %v323 = vld [vmem:[#allocation5 + $0xe0] sm:$0xff]
        %v324 = vld [vmem:[#allocation5 + $0xe8] sm:$0xff]
        %v325 = vld [vmem:[#allocation5 + $0xf0] sm:$0xff]
        %v326 = vld [vmem:[#allocation5 + $0xf8] sm:$0xff]
        %v327 = vld [vmem:[%s2] sm:$0xf]
        %v329 = vlaneseq
        %v330 = vshrl.u32 %v329, 7
        %v331 = vsub.s32 0, %v330
        %v332 = vrot.slane %v327, %v331
        %v333 = vlaneseq
        %v334 = vshrl.u32 %v333, 7
        %v335 = vsub.s32 1, %v334
        %v336 = vrot.slane %v327, %v335
        %v337 = vlaneseq
        %v338 = vshrl.u32 %v337, 7
        %v339 = vsub.s32 2, %v338
        %v340 = vrot.slane %v327, %v339
        %v341 = vlaneseq
        %v342 = vshrl.u32 %v341, 7
        %v343 = vsub.s32 3, %v342
        %v344 = vrot.slane %v327, %v343
        %v381 = vunpack.c.l.b16 %v295
        %v382 = vunpack.c.h.b16 %v295
        %v383 = vunpack.c.l.b16 %v296
        %v384 = vunpack.c.h.b16 %v296
        %v385 = vunpack.c.l.b16 %v297
        %v386 = vunpack.c.h.b16 %v297
        %v387 = vunpack.c.l.b16 %v298
        %v388 = vunpack.c.h.b16 %v298
        %v389 = vunpack.c.l.b16 %v299
        %v390 = vunpack.c.h.b16 %v299
        %v391 = vunpack.c.l.b16 %v300
        %v392 = vunpack.c.h.b16 %v300
        %v393 = vunpack.c.l.b16 %v301
        %v394 = vunpack.c.h.b16 %v301
        %v395 = vunpack.c.l.b16 %v302
        %v396 = vunpack.c.h.b16 %v302
        %v397 = vunpack.c.l.b16 %v303
        %v398 = vunpack.c.h.b16 %v303
        %v399 = vunpack.c.l.b16 %v304
        %v400 = vunpack.c.h.b16 %v304
        %v401 = vunpack.c.l.b16 %v305
        %v402 = vunpack.c.h.b16 %v305
        %v403 = vunpack.c.l.b16 %v306
        %v404 = vunpack.c.h.b16 %v306
        %v405 = vunpack.c.l.b16 %v307
        %v406 = vunpack.c.h.b16 %v307
        %v407 = vunpack.c.l.b16 %v308
        %v408 = vunpack.c.h.b16 %v308
        %v409 = vunpack.c.l.b16 %v309
        %v410 = vunpack.c.h.b16 %v309
        %v411 = vunpack.c.l.b16 %v310
        %v412 = vunpack.c.h.b16 %v310
        %v413 = vunpack.c.l.b16 %v311
        %v414 = vunpack.c.h.b16 %v311
        %v415 = vunpack.c.l.b16 %v312
        %v416 = vunpack.c.h.b16 %v312
        %v417 = vunpack.c.l.b16 %v313
        %v418 = vunpack.c.h.b16 %v313
        %v419 = vunpack.c.l.b16 %v314
        %v420 = vunpack.c.h.b16 %v314
        %v421 = vunpack.c.l.b16 %v315
        %v422 = vunpack.c.h.b16 %v315
        %v423 = vunpack.c.l.b16 %v316
        %v424 = vunpack.c.h.b16 %v316
        %v425 = vunpack.c.l.b16 %v317
        %v426 = vunpack.c.h.b16 %v317
        %v427 = vunpack.c.l.b16 %v318
        %v428 = vunpack.c.h.b16 %v318
        %v429 = vunpack.c.l.b16 %v319
        %v430 = vunpack.c.h.b16 %v319
        %v431 = vunpack.c.l.b16 %v320
        %v432 = vunpack.c.h.b16 %v320
        %v433 = vunpack.c.l.b16 %v321
        %v434 = vunpack.c.h.b16 %v321
        %v435 = vunpack.c.l.b16 %v322
        %v436 = vunpack.c.h.b16 %v322
        %v437 = vunpack.c.l.b16 %v323
        %v438 = vunpack.c.h.b16 %v323
        %v439 = vunpack.c.l.b16 %v324
        %v440 = vunpack.c.h.b16 %v324
        %v441 = vunpack.c.l.b16 %v325
        %v442 = vunpack.c.h.b16 %v325
        %v443 = vunpack.c.l.b16 %v326
        %v444 = vunpack.c.h.b16 %v326
        %v445 = vpack.c.b16 %v385, %v381
        %v446 = vpack.c.b16 %v386, %v382
        %v447 = vpack.c.b16 %v387, %v383
        %v448 = vpack.c.b16 %v388, %v384
        %v449 = vpack.c.b16 %v393, %v389
        %v450 = vpack.c.b16 %v394, %v390
        %v451 = vpack.c.b16 %v395, %v391
        %v452 = vpack.c.b16 %v396, %v392
        %v453 = vpack.c.b16 %v401, %v397
        %v454 = vpack.c.b16 %v402, %v398
        %v455 = vpack.c.b16 %v403, %v399
        %v456 = vpack.c.b16 %v404, %v400
        %v457 = vpack.c.b16 %v409, %v405
        %v458 = vpack.c.b16 %v410, %v406
        %v459 = vpack.c.b16 %v411, %v407
        %v460 = vpack.c.b16 %v412, %v408
        %v461 = vpack.c.b16 %v417, %v413
        %v462 = vpack.c.b16 %v418, %v414
        %v463 = vpack.c.b16 %v419, %v415
        %v464 = vpack.c.b16 %v420, %v416
        %v465 = vpack.c.b16 %v425, %v421
        %v466 = vpack.c.b16 %v426, %v422
        %v467 = vpack.c.b16 %v427, %v423
        %v468 = vpack.c.b16 %v428, %v424
        %v469 = vpack.c.b16 %v433, %v429
        %v470 = vpack.c.b16 %v434, %v430
        %v471 = vpack.c.b16 %v435, %v431
        %v472 = vpack.c.b16 %v436, %v432
        %v473 = vpack.c.b16 %v441, %v437
        %v474 = vpack.c.b16 %v442, %v438
        %v475 = vpack.c.b16 %v443, %v439
        %v476 = vpack.c.b16 %v444, %v440
        %509 = vmatprep.subr.bf16.mxu0 %v446
        %510 = vmatpush1.bf16.msra.mxu0 %v445
        %511 = vmatprep.subr.bf16.mxu0 %v450
        %512 = vmatpush1.bf16.msra.mxu0 %v449
        %513 = vmatprep.subr.bf16.mxu0 %v454
        %514 = vmatpush1.bf16.msra.mxu0 %v453
        %515 = vmatprep.subr.bf16.mxu0 %v458
        %516 = vmatpush1.bf16.msra.mxu0 %v457
        %517 = vmatprep.subr.bf16.mxu0 %v462
        %518 = vmatpush1.bf16.msra.mxu0 %v461
        %519 = vmatprep.subr.bf16.mxu0 %v466
        %520 = vmatpush1.bf16.msra.mxu0 %v465
        %521 = vmatprep.subr.bf16.mxu0 %v470
        %522 = vmatpush1.bf16.msra.mxu0 %v469
        %523 = vmatprep.subr.bf16.mxu0 %v474
        %524 = vmatpush1.bf16.msra.mxu0 %v473
        %525 = vmatprep.subr.bf16.mxu0 0
        %526 = vmatpush1.bf16.msra.mxu0 0
        %527 = vmatprep.subr.bf16.mxu0 0
        %528 = vmatpush1.bf16.msra.mxu0 0
        %529 = vmatprep.subr.bf16.mxu0 0
        %530 = vmatpush1.bf16.msra.mxu0 0
        %531 = vmatprep.subr.bf16.mxu0 0
        %532 = vmatpush1.bf16.msra.mxu0 0
        %533 = vmatprep.subr.bf16.mxu0 0
        %534 = vmatpush1.bf16.msra.mxu0 0
        %535 = vmatprep.subr.bf16.mxu0 0
        %536 = vmatpush1.bf16.msra.mxu0 0
        %537 = vmatprep.subr.bf16.mxu0 0
        %538 = vmatpush1.bf16.msra.mxu0 0
        %539 = vmatprep.subr.bf16.mxu0 0
        %540 = vmatpush1.bf16.msra.mxu0 0
        %541 = vmatprep.mubr.bf16.mxu0 0
        %542 = vmatmul.mubr.bf16.gmra.mrb[0].mxu0 %v293
        %v543 = vpop.f32.mrb[0].mxu0
        %v544 = vadd.f32 %v332, %v543
        %v545 = vpop.f32.mrb[0].mxu0
        %v546 = vadd.f32 %v336, %v545
        %v547 = vpop.f32.mrb[0].mxu0
        %v548 = vadd.f32 %v332, %v547
        %v549 = vpop.f32.mrb[0].mxu0
        %v550 = vadd.f32 %v336, %v549
        %551 = vmatprep.mubr.bf16.mxu0 0
        %552 = vmatmul.mubr.bf16.gmra.mrb[0].mxu0 %v294
        %v553 = vpop.f32.mrb[0].mxu0
        %v554 = vadd.f32 %v332, %v553
        %v555 = vpop.f32.mrb[0].mxu0
        %v556 = vadd.f32 %v336, %v555
        %v557 = vpop.f32.mrb[0].mxu0
        %v558 = vadd.f32 %v332, %v557
        %v559 = vpop.f32.mrb[0].mxu0
        %v560 = vadd.f32 %v336, %v559
        %561 = vdwg.mxu0
        %562 = vmatprep.subr.bf16.mxu0 %v448
        %563 = vmatpush1.bf16.msra.mxu0 %v447
        %564 = vmatprep.subr.bf16.mxu0 %v452
        %565 = vmatpush1.bf16.msra.mxu0 %v451
        %566 = vmatprep.subr.bf16.mxu0 %v456
        %567 = vmatpush1.bf16.msra.mxu0 %v455
        %568 = vmatprep.subr.bf16.mxu0 %v460
        %569 = vmatpush1.bf16.msra.mxu0 %v459
        %570 = vmatprep.subr.bf16.mxu0 %v464
        %571 = vmatpush1.bf16.msra.mxu0 %v463
        %572 = vmatprep.subr.bf16.mxu0 %v468
        %573 = vmatpush1.bf16.msra.mxu0 %v467
        %574 = vmatprep.subr.bf16.mxu0 %v472
        %575 = vmatpush1.bf16.msra.mxu0 %v471
        %576 = vmatprep.subr.bf16.mxu0 %v476
        %577 = vmatpush1.bf16.msra.mxu0 %v475
        %578 = vmatprep.subr.bf16.mxu0 0
        %579 = vmatpush1.bf16.msra.mxu0 0
        %580 = vmatprep.subr.bf16.mxu0 0
        %581 = vmatpush1.bf16.msra.mxu0 0
        %582 = vmatprep.subr.bf16.mxu0 0
        %583 = vmatpush1.bf16.msra.mxu0 0
        %584 = vmatprep.subr.bf16.mxu0 0
        %585 = vmatpush1.bf16.msra.mxu0 0
        %586 = vmatprep.subr.bf16.mxu0 0
        %587 = vmatpush1.bf16.msra.mxu0 0
        %588 = vmatprep.subr.bf16.mxu0 0
        %589 = vmatpush1.bf16.msra.mxu0 0
        %590 = vmatprep.subr.bf16.mxu0 0
        %591 = vmatpush1.bf16.msra.mxu0 0
        %592 = vmatprep.subr.bf16.mxu0 0
        %593 = vmatpush1.bf16.msra.mxu0 0
        %594 = vmatprep.mubr.bf16.mxu0 0
        %595 = vmatmul.mubr.bf16.gmra.mrb[0].mxu0 %v293
        %v596 = vpop.f32.mrb[0].mxu0
        %v597 = vadd.f32 %v340, %v596
        %v598 = vpop.f32.mrb[0].mxu0
        %v599 = vadd.f32 %v344, %v598
        %v600 = vpop.f32.mrb[0].mxu0
        %v601 = vadd.f32 %v340, %v600
        %v602 = vpop.f32.mrb[0].mxu0
        %v603 = vadd.f32 %v344, %v602
        %604 = vmatprep.mubr.bf16.mxu0 0
        %605 = vmatmul.mubr.bf16.gmra.mrb[0].mxu0 %v294
        %v606 = vpop.f32.mrb[0].mxu0
        %v607 = vadd.f32 %v340, %v606
        %v608 = vpop.f32.mrb[0].mxu0
        %v609 = vadd.f32 %v344, %v608
        %v610 = vpop.f32.mrb[0].mxu0
        %v611 = vadd.f32 %v340, %v610
        %v612 = vpop.f32.mrb[0].mxu0
        %v613 = vadd.f32 %v344, %v612
        %614 = vdwg.mxu0
        %v615 = vmax.f32 %v544, 0.0
        %v616 = vmax.f32 %v546, 0.0
        %v617 = vmax.f32 %v597, 0.0
        %v618 = vmax.f32 %v599, 0.0
        %v619 = vmax.f32 %v548, 0.0
        %v620 = vmax.f32 %v550, 0.0
        %v621 = vmax.f32 %v601, 0.0
        %v622 = vmax.f32 %v603, 0.0
        %v623 = vmax.f32 %v554, 0.0
        %v624 = vmax.f32 %v556, 0.0
        %v625 = vmax.f32 %v607, 0.0
        %v626 = vmax.f32 %v609, 0.0
        %v627 = vmax.f32 %v558, 0.0
        %v628 = vmax.f32 %v560, 0.0
        %v629 = vmax.f32 %v611, 0.0
        %v630 = vmax.f32 %v613, 0.0
        %v631 = vpack.c.bf16 %v619, %v615
        %v632 = vpack.c.bf16 %v620, %v616
        %v633 = vpack.c.bf16 %v627, %v623
        %v634 = vpack.c.bf16 %v628, %v624
        %v635 = vld [vmem:[%s256] sm:$0xff]
        %v636 = vld [vmem:[%s256 + $0x8] sm:$0xff]
        %v637 = vld [vmem:[%s256 + $0x10] sm:$0xff]
        %v638 = vld [vmem:[%s256 + $0x18] sm:$0xff]
        %v639 = vld [vmem:[%s256 + $0x20] sm:$0xff]
        %v640 = vld [vmem:[%s256 + $0x28] sm:$0xff]
        %v641 = vld [vmem:[%s256 + $0x30] sm:$0xff]
        %v642 = vld [vmem:[%s256 + $0x38] sm:$0xff]
        %v643 = vld [vmem:[%s256 + $0x40] sm:$0xff]
        %v644 = vld [vmem:[%s256 + $0x48] sm:$0xff]
        %v645 = vld [vmem:[%s256 + $0x50] sm:$0xff]
        %v646 = vld [vmem:[%s256 + $0x58] sm:$0xff]
        %v647 = vld [vmem:[%s256 + $0x60] sm:$0xff]
        %v648 = vld [vmem:[%s256 + $0x68] sm:$0xff]
        %v649 = vld [vmem:[%s256 + $0x70] sm:$0xff]
        %v650 = vld [vmem:[%s256 + $0x78] sm:$0xff]
        %v651 = vld [vmem:[%s256 + $0x80] sm:$0xff]
        %v652 = vld [vmem:[%s256 + $0x88] sm:$0xff]
        %v653 = vld [vmem:[%s256 + $0x90] sm:$0xff]
        %v654 = vld [vmem:[%s256 + $0x98] sm:$0xff]
        %v655 = vld [vmem:[%s256 + $0xa0] sm:$0xff]
        %v656 = vld [vmem:[%s256 + $0xa8] sm:$0xff]
        %v657 = vld [vmem:[%s256 + $0xb0] sm:$0xff]
        %v658 = vld [vmem:[%s256 + $0xb8] sm:$0xff]
        %v659 = vld [vmem:[%s256 + $0xc0] sm:$0xff]
        %v660 = vld [vmem:[%s256 + $0xc8] sm:$0xff]
        %v661 = vld [vmem:[%s256 + $0xd0] sm:$0xff]
        %v662 = vld [vmem:[%s256 + $0xd8] sm:$0xff]
        %v663 = vld [vmem:[%s256 + $0xe0] sm:$0xff]
        %v664 = vld [vmem:[%s256 + $0xe8] sm:$0xff]
        %v665 = vld [vmem:[%s256 + $0xf0] sm:$0xff]
        %v666 = vld [vmem:[%s256 + $0xf8] sm:$0xff]
        %v699 = vunpack.c.l.b16 %v635
        %v700 = vunpack.c.h.b16 %v635
        %v701 = vunpack.c.l.b16 %v636
        %v702 = vunpack.c.h.b16 %v636
        %v703 = vunpack.c.l.b16 %v637
        %v704 = vunpack.c.h.b16 %v637
        %v705 = vunpack.c.l.b16 %v638
        %v706 = vunpack.c.h.b16 %v638
        %v707 = vunpack.c.l.b16 %v639
        %v708 = vunpack.c.h.b16 %v639
        %v709 = vunpack.c.l.b16 %v640
        %v710 = vunpack.c.h.b16 %v640
        %v711 = vunpack.c.l.b16 %v641
        %v712 = vunpack.c.h.b16 %v641
        %v713 = vunpack.c.l.b16 %v642
        %v714 = vunpack.c.h.b16 %v642
        %v715 = vunpack.c.l.b16 %v643
        %v716 = vunpack.c.h.b16 %v643
        %v717 = vunpack.c.l.b16 %v644
        %v718 = vunpack.c.h.b16 %v644
        %v719 = vunpack.c.l.b16 %v645
        %v720 = vunpack.c.h.b16 %v645
        %v721 = vunpack.c.l.b16 %v646
        %v722 = vunpack.c.h.b16 %v646
        %v723 = vunpack.c.l.b16 %v647
        %v724 = vunpack.c.h.b16 %v647
        %v725 = vunpack.c.l.b16 %v648
        %v726 = vunpack.c.h.b16 %v648
        %v727 = vunpack.c.l.b16 %v649
        %v728 = vunpack.c.h.b16 %v649
        %v729 = vunpack.c.l.b16 %v650
        %v730 = vunpack.c.h.b16 %v650
        %v731 = vunpack.c.l.b16 %v651
        %v732 = vunpack.c.h.b16 %v651
        %v733 = vunpack.c.l.b16 %v652
        %v734 = vunpack.c.h.b16 %v652
        %v735 = vunpack.c.l.b16 %v653
        %v736 = vunpack.c.h.b16 %v653
        %v737 = vunpack.c.l.b16 %v654
        %v738 = vunpack.c.h.b16 %v654
        %v739 = vunpack.c.l.b16 %v655
        %v740 = vunpack.c.h.b16 %v655
        %v741 = vunpack.c.l.b16 %v656
        %v742 = vunpack.c.h.b16 %v656
        %v743 = vunpack.c.l.b16 %v657
        %v744 = vunpack.c.h.b16 %v657
        %v745 = vunpack.c.l.b16 %v658
        %v746 = vunpack.c.h.b16 %v658
        %v747 = vunpack.c.l.b16 %v659
        %v748 = vunpack.c.h.b16 %v659
        %v749 = vunpack.c.l.b16 %v660
        %v750 = vunpack.c.h.b16 %v660
        %v751 = vunpack.c.l.b16 %v661
        %v752 = vunpack.c.h.b16 %v661
        %v753 = vunpack.c.l.b16 %v662
        %v754 = vunpack.c.h.b16 %v662
        %v755 = vunpack.c.l.b16 %v663
        %v756 = vunpack.c.h.b16 %v663
        %v757 = vunpack.c.l.b16 %v664
        %v758 = vunpack.c.h.b16 %v664
        %v759 = vunpack.c.l.b16 %v665
        %v760 = vunpack.c.h.b16 %v665
        %v761 = vunpack.c.l.b16 %v666
        %v762 = vunpack.c.h.b16 %v666
        %v763 = vpack.c.b16 %v701, %v699
        %v764 = vpack.c.b16 %v702, %v700
        %v765 = vpack.c.b16 %v705, %v703
        %v766 = vpack.c.b16 %v706, %v704
        %v767 = vpack.c.b16 %v709, %v707
        %v768 = vpack.c.b16 %v710, %v708
        %v769 = vpack.c.b16 %v713, %v711
        %v770 = vpack.c.b16 %v714, %v712
        %v771 = vpack.c.b16 %v717, %v715
        %v772 = vpack.c.b16 %v718, %v716
        %v773 = vpack.c.b16 %v721, %v719
        %v774 = vpack.c.b16 %v722, %v720
        %v775 = vpack.c.b16 %v725, %v723
        %v776 = vpack.c.b16 %v726, %v724
        %v777 = vpack.c.b16 %v729, %v727
        %v778 = vpack.c.b16 %v730, %v728
        %v779 = vpack.c.b16 %v733, %v731
        %v780 = vpack.c.b16 %v734, %v732
        %v781 = vpack.c.b16 %v737, %v735
        %v782 = vpack.c.b16 %v738, %v736
        %v783 = vpack.c.b16 %v741, %v739
        %v784 = vpack.c.b16 %v742, %v740
        %v785 = vpack.c.b16 %v745, %v743
        %v786 = vpack.c.b16 %v746, %v744
        %v787 = vpack.c.b16 %v749, %v747
        %v788 = vpack.c.b16 %v750, %v748
        %v789 = vpack.c.b16 %v753, %v751
        %v790 = vpack.c.b16 %v754, %v752
        %v791 = vpack.c.b16 %v757, %v755
        %v792 = vpack.c.b16 %v758, %v756
        %v793 = vpack.c.b16 %v761, %v759
        %v794 = vpack.c.b16 %v762, %v760
        %827 = vmatprep.subr.bf16.mxu0 %v764
        %828 = vmatpush1.bf16.msra.mxu0 %v763
        %829 = vmatprep.subr.bf16.mxu0 %v766
        %830 = vmatpush1.bf16.msra.mxu0 %v765
        %831 = vmatprep.subr.bf16.mxu0 %v768
        %832 = vmatpush1.bf16.msra.mxu0 %v767
        %833 = vmatprep.subr.bf16.mxu0 %v770
        %834 = vmatpush1.bf16.msra.mxu0 %v769
        %835 = vmatprep.subr.bf16.mxu0 %v772
        %836 = vmatpush1.bf16.msra.mxu0 %v771
        %837 = vmatprep.subr.bf16.mxu0 %v774
        %838 = vmatpush1.bf16.msra.mxu0 %v773
        %839 = vmatprep.subr.bf16.mxu0 %v776
        %840 = vmatpush1.bf16.msra.mxu0 %v775
        %841 = vmatprep.subr.bf16.mxu0 %v778
        %842 = vmatpush1.bf16.msra.mxu0 %v777
        %843 = vmatprep.subr.bf16.mxu0 %v780
        %844 = vmatpush1.bf16.msra.mxu0 %v779
        %845 = vmatprep.subr.bf16.mxu0 %v782
        %846 = vmatpush1.bf16.msra.mxu0 %v781
        %847 = vmatprep.subr.bf16.mxu0 %v784
        %848 = vmatpush1.bf16.msra.mxu0 %v783
        %849 = vmatprep.subr.bf16.mxu0 %v786
        %850 = vmatpush1.bf16.msra.mxu0 %v785
        %851 = vmatprep.subr.bf16.mxu0 %v788
        %852 = vmatpush1.bf16.msra.mxu0 %v787
        %853 = vmatprep.subr.bf16.mxu0 %v790
        %854 = vmatpush1.bf16.msra.mxu0 %v789
        %855 = vmatprep.subr.bf16.mxu0 %v792
        %856 = vmatpush1.bf16.msra.mxu0 %v791
        %857 = vmatprep.subr.bf16.mxu0 %v794
        %858 = vmatpush1.bf16.msra.mxu0 %v793
        %859 = vmatprep.mubr.bf16.mxu0 %v632
        %860 = vmatmul.mubr.bf16.gmra.mrb[0].mxu0 %v631
        %v861 = vpop.f32.mrb[0].mxu0
        %v862 = vadd.f32 0.0, %v861
        %v863 = vpop.f32.mrb[0].mxu0
        %v864 = vadd.f32 0.0, %v863
        %v865 = vpop.f32.mrb[0].mxu0
        %v866 = vadd.f32 0.0, %v865
        %v867 = vpop.f32.mrb[0].mxu0
        %v868 = vadd.f32 0.0, %v867
        %869 = vmatprep.mubr.bf16.mxu0 %v634
        %870 = vmatmul.mubr.bf16.gmra.mrb[0].mxu0 %v633
        %v871 = vpop.f32.mrb[0].mxu0
        %v872 = vadd.f32 0.0, %v871
        %v873 = vpop.f32.mrb[0].mxu0
        %v874 = vadd.f32 0.0, %v873
        %v875 = vpop.f32.mrb[0].mxu0
        %v876 = vadd.f32 0.0, %v875
        %v877 = vpop.f32.mrb[0].mxu0
        %v878 = vadd.f32 0.0, %v877
        %879 = vdwg.mxu0
        %v880 = vsub.f32 0.0, %v862
        %v881 = vsub.f32 0.0, %v864
        %v882 = vsub.f32 0.0, %v866
        %v883 = vsub.f32 0.0, %v868
        %v884 = vsub.f32 0.0, %v872
        %v885 = vsub.f32 0.0, %v874
        %v886 = vsub.f32 0.0, %v876
        %v887 = vsub.f32 0.0, %v878
        %v888 = vmul.f32 %v880, 1.442695
        %v889 = vpow.pop %v888
        %v890 = vmul.f32 %v881, 1.442695
        %v891 = vpow.pop %v890
        %v892 = vmul.f32 %v882, 1.442695
        %v893 = vpow.pop %v892
        %v894 = vmul.f32 %v883, 1.442695
        %v895 = vpow.pop %v894
        %v896 = vmul.f32 %v884, 1.442695
        %v897 = vpow.pop %v896
        %v898 = vmul.f32 %v885, 1.442695
        %v899 = vpow.pop %v898
        %v900 = vmul.f32 %v886, 1.442695
        %v901 = vpow.pop %v900
        %v902 = vmul.f32 %v887, 1.442695
        %v903 = vpow.pop %v902
        %v904 = vadd.f32 %v889, 1.0
        %v905 = vadd.f32 %v891, 1.0
        %v906 = vadd.f32 %v893, 1.0
        %v907 = vadd.f32 %v895, 1.0
        %v908 = vadd.f32 %v897, 1.0
        %v909 = vadd.f32 %v899, 1.0
        %v910 = vadd.f32 %v901, 1.0
        %v911 = vadd.f32 %v903, 1.0
        %v912 = vrcp.pop %v904
        %v913 = vrcp.pop %v905
        %v914 = vrcp.pop %v906
        %v915 = vrcp.pop %v907
        %v916 = vrcp.pop %v908
        %v917 = vrcp.pop %v909
        %v918 = vrcp.pop %v910
        %v919 = vrcp.pop %v911
        %v920 = vmul.f32 %v912, %v617
        %v921 = vmul.f32 %v913, %v618
        %v922 = vmul.f32 %v914, %v621
        %v923 = vmul.f32 %v915, %v622
        %v924 = vmul.f32 %v916, %v625
        %v925 = vmul.f32 %v917, %v626
        %v926 = vmul.f32 %v918, %v629
        %v927 = vmul.f32 %v919, %v630
        %v928 = vpack.c.bf16 %v922, %v920
        %v929 = vpack.c.bf16 %v923, %v921
        %v930 = vpack.c.bf16 %v926, %v924
        %v931 = vpack.c.bf16 %v927, %v925
        %v936 = vunpack.c.l.b16 %v928
        %v937 = vunpack.c.l.b16 %v929
        %v938 = vunpack.c.h.b16 %v928
        %v939 = vunpack.c.h.b16 %v929
        %v940 = vunpack.c.l.b16 %v930
        %v941 = vunpack.c.l.b16 %v931
        %v942 = vunpack.c.h.b16 %v930
        %v943 = vunpack.c.h.b16 %v931
        %v944 = vpack.c.b16 %v937, %v936
        %v945 = vpack.c.b16 %v939, %v938
        %v946 = vpack.c.b16 %v941, %v940
        %v947 = vpack.c.b16 %v943, %v942
        %952 = vst [vmem:[%s285] sm:$0xff] %v944
        %953 = vst [vmem:[%s285 + $0x8] sm:$0xff] %v945
        %954 = vst [vmem:[%s285 + $0x10] sm:$0xff] %v946
        %955 = vst [vmem:[%s285 + $0x18] sm:$0xff] %v947
        %s956 = sand.u32 %s140, 1
        %s957 = scalar_lea.sflag [#allocation4], %s956
        %s958 = sand.u32 %s140, 1
        %s959 = smul.addr %s958, 32
        %s960 = scalar_lea.vmem [#allocation8], %s959
        // Predicated region
        $region49: #{tpu_custom_call.1} parent=35 // pred_check
          %p961 = pneg %p150
        $region50: #{tpu_custom_call.1} parent=35 // pred_check_branch
          %963 = sbr.rel (%p961) target = $region52
        $region51: #{tpu_custom_call.1} parent=35 // pred_region
          %s964 = smul.u32 4, %s27
          %s966 = ssub.s32 512, 512
          %967 = vsyncadd %s957, %s966
          %s968 = smul.addr %s964, 2
          %s969 = smul.addr %s26, 8
          %s970 = sadd.s32 %s968, %s969
          %s971 = smul.addr %s970, 64
          %s972 = scalar_lea.hbm %s4, %s971
          %s973 = sshll.u32 %s960, 4
          %s974 = int_to_ptr.vmem [resolvable:$true] %s973
          %979 = dma.vmem_to_hbm [thread:$0]  %s974, 512, %s972, %s957, 128, 128, 8
        $region52: #{tpu_custom_call.1} parent=35 // pred_fallthru
          _
      $region36: #{tpu_custom_call.1} parent=5 // pred_fallthru
        _
      %p980 = scmp.le.s32.totalorder 2, %s17
      // Predicated region
      $region53: #{tpu_custom_call.1} parent=5 // pred_check
        %p981 = pneg %p980
      $region54: #{tpu_custom_call.1} parent=5 // pred_check_branch
        %983 = sbr.rel (%p981) target = $region56
      $region55: #{tpu_custom_call.1} parent=5 // pred_region
        %s984 = ssub.s32 %s17, 2
        // Predicated region
        $region57: #{tpu_custom_call.1} parent=55 // pred_check
          %p985 = pneg %p156
        $region58: #{tpu_custom_call.1} parent=55 // pred_check_branch
          %987 = sbr.rel (%p985) target = $region60
        $region59: #{tpu_custom_call.1} parent=55 // pred_region
          %s988 = sand.u32 %s141, 1
          %s989 = scalar_lea.sflag [#allocation4], %s988
          %s990 = sand.u32 %s141, 1
          %s991 = smul.addr %s990, 32
          %s992 = scalar_lea.vmem [#allocation8], %s991
          %993 = dma.done %s989, 512
        $region60: #{tpu_custom_call.1} parent=55 // pred_fallthru
          _
      $region56: #{tpu_custom_call.1} parent=5 // pred_fallthru
        _
    $region6: #{tpu_custom_call.1} parent=1 // loop_footer
      %s21 = sadd.s32 1, %s17
    $region7: #{tpu_custom_call.1} parent=1 // loop_footer_branch
      %16 = sbr.rel target = $region3
    $region8: #{tpu_custom_call.1} parent=1 // loop_exit
      _
    %994 = vsyncpa [#allocation3], 1
    %s995 = scalar_lea.sflag [#allocation3], 1
    %996 = vsyncpa %s995, 1
    %997 = vsyncpa [#allocation6], 1
    %998 = vsyncpa [#allocation4], 1
    %s999 = scalar_lea.sflag [#allocation4], 1
    %1000 = vsyncpa %s999, 1

</llo_original>
